<compile_context>
chip_gen: v5e
topology: v5e:2x2
jax: 0.10.0
libtpu: 0.0.40
codegen_flags: <defaults>
</compile_context>

<pallas_src>
import math

import jax
import jax.numpy as jnp
from jax import lax
from jax.experimental import pallas as pl
from jax.experimental.pallas import tpu as pltpu


# ---------------------------------------------------------------------------
# helpers
# ---------------------------------------------------------------------------
def _round_up(x, m):
    return ((x + m - 1) // m) * m


def _pad2d(a, rows, cols):
    r, c = a.shape
    if r == rows and c == cols:
        return a
    return jnp.pad(a, ((0, rows - r), (0, cols - c)))


def _vmem_budget_bytes():
    """Per-kernel scoped-VMEM budget, derived from the actual chip if possible."""
    cap = 64 * 1024 * 1024
    try:
        info = pltpu.get_tpu_info()
        cap = int(getattr(info, "vmem_capacity_bytes", cap))
    except Exception:
        pass
    # ~25% headroom for Mosaic internal scratch / semaphores, capped at 100 MiB.
    return min(cap * 3 // 4, 100 * 1024 * 1024)


def _pick_tiles_k1(Np, Ap, itemsize, budget):
    """Row tile / contraction tile for the fused LWt + K_ZZ kernel."""
    # Prefer a large row tile first (amortizes re-streaming of W's k-columns),
    # then a large contraction tile.
    for tr in (1024, 512, 256, 128):
        if Np % tr:
            continue
        for tk in (2048, 1024, 512, 256, 128):
            if Np % tk:
                continue
            foot = (2 * tr * tk * itemsize      # L tile (double buffered)
                    + 2 * Ap * tk * itemsize    # W k-columns (double buffered)
                    + 2 * Ap * tr * itemsize    # W row-columns (K_ZZ dot)
                    + 2 * tr * Ap * itemsize    # LWt output tile
                    + tr * Ap * 4               # f32 LWt accumulator scratch
                    + 2 * Ap * Ap * 4)          # K_ZZ output block
            if foot <= budget:
                return tr, tk
    return 128, 128


def _pick_tiles_k2(Np, Ap, itemsize, budget):
    """Batch tile / contraction tile for the projection kernel."""
    for tm in (512, 256, 128):
        for tk in (4096, 2048, 1024, 512, 256, 128):
            if Np % tk:
                continue
            foot = (2 * tm * tk * itemsize      # x tile
                    + 2 * tk * Ap * itemsize    # LWt k-tile
                    + Ap * Ap * itemsize        # lintrans (single buffered)
                    + 2 * tm * Ap * 4           # output tile
                    + tm * Ap * 4)              # f32 accumulator scratch
            if foot <= budget:
                return tm, tk
    return 128, 128


# ---------------------------------------------------------------------------
# Kernel 1: stream L once (bf16), K-tiled, producing
#     LWt  = L @ W.T                (num_nodes, num_anchors)  [streaming dtype]
#     K_ZZ = W @ L @ W.T  partials  (nsplit, num_anchors, num_anchors)  [f32]
# Grid = (core_split, row_tiles, k_tiles); leading axis "parallel" (v7x 2 TCs),
# the other two "arbitrary" (accumulation).
# ---------------------------------------------------------------------------
def _lwt_kzz_kernel(l_ref, wk_ref, wi_ref, lwt_ref, kzz_ref, acc_ref):
    i = pl.program_id(1)
    k = pl.program_id(2)
    nk = pl.num_programs(2)

    @pl.when(k == 0)
    def _():
        acc_ref[...] = jnp.zeros_like(acc_ref)

    @pl.when(jnp.logical_and(i == 0, k == 0))
    def _():
        kzz_ref[...] = jnp.zeros_like(kzz_ref)

    # Partial LWt tile:  L[rows, kcols] @ W[:, kcols].T  (f32 accumulation).
    acc_ref[...] += lax.dot_general(
        l_ref[...], wk_ref[...],
        dimension_numbers=(((1,), (1,)), ((), ())),
        preferred_element_type=jnp.float32)

    @pl.when(k == nk - 1)
    def _():
        lwt_tile = acc_ref[...]
        lwt_ref[...] = lwt_tile.astype(lwt_ref.dtype)
        # Per-core K_ZZ partial:  W[:, rows] @ LWt[rows, :]
        kzz_ref[0, :, :] += jnp.dot(
            wi_ref[...], lwt_tile.astype(wi_ref.dtype),
            preferred_element_type=jnp.float32)


def lwt_and_kzz(L_p, W_p, budget):
    Np = L_p.shape[0]
    Ap = W_p.shape[0]
    dt = L_p.dtype
    itemsize = jnp.dtype(dt).itemsize

    tr, tk = _pick_tiles_k1(Np, Ap, itemsize, budget)
    n_rows = Np // tr
    nsplit = 2 if n_rows % 2 == 0 else 1      # v7x: one half per TensorCore
    ni = n_rows // nsplit
    nk = Np // tk

    cost = pl.CostEstimate(
        flops=2 * Np * Np * Ap + 2 * Ap * Np * Ap,
        transcendentals=0,
        bytes_accessed=(Np * Np * itemsize            # L streamed once
                        + n_rows * Ap * Np * itemsize # W k-cols (per row tile)
                        + Ap * Np * itemsize          # W row-cols
                        + Np * Ap * itemsize          # LWt out
                        + nsplit * Ap * Ap * 4))      # K_ZZ partials

    return pl.pallas_call(
        _lwt_kzz_kernel,
        out_shape=(jax.ShapeDtypeStruct((Np, Ap), dt),
                   jax.ShapeDtypeStruct((nsplit, Ap, Ap), jnp.float32)),
        grid_spec=pltpu.PrefetchScalarGridSpec(
            num_scalar_prefetch=0,
            grid=(nsplit, ni, nk),
            in_specs=[
                pl.BlockSpec((tr, tk), lambda s, i, k: (s * ni + i, k)),   # L
                pl.BlockSpec((Ap, tk), lambda s, i, k: (0, k)),            # W k-cols
                pl.BlockSpec((Ap, tr), lambda s, i, k: (0, s * ni + i)),   # W row-cols
            ],
            out_specs=(
                pl.BlockSpec((tr, Ap), lambda s, i, k: (s * ni + i, 0)),   # LWt
                pl.BlockSpec((1, Ap, Ap), lambda s, i, k: (s, 0, 0)),      # K_ZZ part
            ),
            scratch_shapes=[pltpu.VMEM((tr, Ap), jnp.float32)],
        ),
        compiler_params=pltpu.CompilerParams(
            dimension_semantics=("parallel", "arbitrary", "arbitrary"),
            vmem_limit_bytes=budget),
        cost_estimate=cost,
    )(L_p, W_p, W_p)


# ---------------------------------------------------------------------------
# Kernel 2 (fused batch path):  out = (x @ LWt) @ lintrans
# Grid = (batch_tiles "parallel", k_tiles "arbitrary"); f32 accumulator,
# lintrans applied in a pl.when(last-k) epilogue; lintrans single-buffered.
# ---------------------------------------------------------------------------
def _project_kernel(x_ref, lwt_ref, lt_ref, o_ref, acc_ref):
    k = pl.program_id(1)

    @pl.when(k == 0)
    def _():
        acc_ref[...] = jnp.zeros_like(acc_ref)

    acc_ref[...] += jnp.dot(x_ref[...], lwt_ref[...],
                            preferred_element_type=jnp.float32)

    @pl.when(k == pl.num_programs(1) - 1)
    def _():
        o_ref[...] = jnp.dot(
            acc_ref[...].astype(lt_ref.dtype), lt_ref[...],
            preferred_element_type=jnp.float32).astype(o_ref.dtype)


def project_batch(x_p, lwt_p, lt_p, tm, tk, budget):
    Bp, Np = x_p.shape
    Ap = lwt_p.shape[1]
    itemsize = jnp.dtype(x_p.dtype).itemsize
    nb = Bp // tm
    nk = Np // tk

    cost = pl.CostEstimate(
        flops=2 * Bp * Np * Ap + 2 * Bp * Ap * Ap,
        transcendentals=0,
        bytes_accessed=(Bp * Np * itemsize + nb * Np * Ap * itemsize
                        + Ap * Ap * itemsize + Bp * Ap * 4))

    # LWt blocks change with k (normal double buffering); when there is only a
    # single k tile the index is constant, so single-buffer it.
    lwt_kwargs = {"pipeline_mode": pl.Buffered(1)} if nk == 1 else {}
    lwt_spec = pl.BlockSpec((tk, Ap), lambda i, k: (k, 0), **lwt_kwargs)
    lt_spec = pl.BlockSpec((Ap, Ap), lambda i, k: (0, 0),
                           pipeline_mode=pl.Buffered(1))

    return pl.pallas_call(
        _project_kernel,
        out_shape=jax.ShapeDtypeStruct((Bp, Ap), jnp.float32),
        grid_spec=pltpu.PrefetchScalarGridSpec(
            num_scalar_prefetch=0,
            grid=(nb, nk),
            in_specs=[
                pl.BlockSpec((tm, tk), lambda i, k: (i, k)),   # x batch tile
                lwt_spec,                                      # LWt k-tile
                lt_spec,                                       # lintrans (resident)
            ],
            out_specs=pl.BlockSpec((tm, Ap), lambda i, k: (i, 0)),
            scratch_shapes=[pltpu.VMEM((tm, Ap), jnp.float32)],
        ),
        compiler_params=pltpu.CompilerParams(
            dimension_semantics=("parallel", "arbitrary"),
            vmem_limit_bytes=budget),
        cost_estimate=cost,
    )(x_p, lwt_p, lt_p)


# ---------------------------------------------------------------------------
# MatrixInverseSqrt.forward (UPLO='U') in plain JAX.
# TODO(synk): torch.linalg.eigh has no Pallas TPU equivalent; the tiny (A, A)
# inverse square root stays in XLA.
# ---------------------------------------------------------------------------
def _matrix_inverse_sqrt(k, eps=0.01):
    k_sym = jnp.triu(k) + jnp.triu(k, 1).T            # UPLO='U' semantics
    e, v = jnp.linalg.eigh(k_sym)
    e = jnp.clip(e, 0.0, None)
    e_rsqrt = 1.0 / (jnp.sqrt(e) + eps)
    return (v * e_rsqrt[None, :]) @ v.T               # V diag(e_rsqrt) V.T


# ---------------------------------------------------------------------------
# GLKLayer forward
# ---------------------------------------------------------------------------
def glk_forward(x_in, L, weight, eps=0.01, matmul_dtype=jnp.bfloat16):
    B, N = x_in.shape
    A, N2 = weight.shape
    assert N2 == N and L.shape == (N, N)

    dt = jnp.dtype(matmul_dtype)
    itemsize = dt.itemsize
    Np = _round_up(N, 128)
    Ap = _round_up(A, 128)
    budget = _vmem_budget_bytes()

    # Cast to the streaming dtype BEFORE padding so no padded f32 copies of
    # the large operands are ever materialized in HBM.
    L_p = _pad2d(L.astype(dt), Np, Np)
    W_p = _pad2d(weight.astype(dt), Ap, Np)

    # 1) Stream L once: LWt = L @ W.T (streaming dtype) and per-core partial
    #    K_ZZ = W @ L @ W.T (f32 accumulation).
    lwt_p, kzz_parts = lwt_and_kzz(L_p, W_p, budget)
    kzz = jnp.sum(kzz_parts, axis=0)[:A, :A]

    # 2) lintrans = K_ZZ^{-1/2} on the exact (A, A) block.
    lintrans = _matrix_inverse_sqrt(kzz.astype(jnp.float32), eps=eps)
    lt_p = _pad2d(lintrans.astype(dt), Ap, Ap)

    # 3) Fused, batch-parallel projection: (x @ LWt) @ lintrans.
    tm, tk2 = _pick_tiles_k2(Np, Ap, itemsize, budget)
    tm = min(tm, _round_up(B, 8))
    Bp = _round_up(B, tm)
    x_p = _pad2d(x_in.astype(dt), Bp, Np)

    out_p = project_batch(x_p, lwt_p, lt_p, tm, tk2, budget)
    return out_p[:B, :A]


# ---------------------------------------------------------------------------
# Plain-JAX reference (mirrors GLKLayer.forward) for sanity checking.
# ---------------------------------------------------------------------------
def glk_reference(x_in, L, weight, eps=0.01):
    x_kernel = x_in @ L @ weight.T
    k_zz = weight @ L @ weight.T
    lintrans = _matrix_inverse_sqrt(k_zz, eps=eps)
    return x_kernel @ lintrans


# ---------------------------------------------------------------------------
# Deterministic parameter init (kaiming_uniform_ with a=sqrt(5))
# ---------------------------------------------------------------------------
def kaiming_uniform(key, shape, fan_in):
    a = math.sqrt(5.0)
    gain = math.sqrt(2.0 / (1.0 + a * a))
    bound = gain * math.sqrt(3.0 / fan_in)
    return jax.random.uniform(key, shape, jnp.float32, minval=-bound, maxval=bound)


if __name__ == "__main__":
    num_nodes = 16
    num_anchors = 8
    batch = 8

    key = jax.random.PRNGKey(0)
    k_w, k_l, k_x = jax.random.split(key, 3)

    weight = kaiming_uniform(k_w, (num_anchors, num_nodes), fan_in=num_nodes)
    L = kaiming_uniform(k_l, (num_nodes, num_nodes), fan_in=num_nodes)
    x = jax.random.normal(k_x, (batch, num_nodes), jnp.float32)

    # Correctness check with f32 streaming (tight-ish tolerance).
    out_f32 = jax.block_until_ready(
        glk_forward(x, L, weight, matmul_dtype=jnp.float32))
    ref = jax.block_until_ready(glk_reference(x, L, weight))
    assert out_f32.shape == (batch, num_anchors)
    assert jnp.allclose(out_f32, ref, rtol=1e-2, atol=1e-2)

    # Default fast path: bf16 streaming, f32 MXU accumulation.
    out = jax.block_until_ready(glk_forward(x, L, weight))
    assert out.shape == (batch, num_anchors)
    assert jnp.all(jnp.isfinite(out))

    print("KERNEL_OK")
</pallas_src>

<mosaic_0001>
module attributes {stable_mosaic.version = 11 : i64} {
  func.func @_lwt_kzz_kernel(%arg0: i32, %arg1: i32, %arg2: i32, %arg3: memref<128x128xf32, #tpu.memory_space<vmem>>, %arg4: memref<128x128xf32, #tpu.memory_space<vmem>>, %arg5: memref<128x128xf32, #tpu.memory_space<vmem>>, %arg6: memref<128x128xf32, #tpu.memory_space<vmem>>, %arg7: memref<1x128x128xf32, #tpu.memory_space<vmem>>, %arg8: memref<128x128xf32, #tpu.memory_space<vmem>>) attributes {dimension_semantics = [#tpu.dimension_semantics<parallel>, #tpu.dimension_semantics<arbitrary>, #tpu.dimension_semantics<arbitrary>], iteration_bounds = array<i64: 1, 1, 1>, scalar_prefetch = 0 : i64, scratch_operands = 1 : i64, tpu.core_type = #tpu.core_type<tc>, window_params = [{transform_indices = @transform_0, window_bounds = array<i64: 128, 128>}, {transform_indices = @transform_1, window_bounds = array<i64: 128, 128>}, {transform_indices = @transform_2, window_bounds = array<i64: 128, 128>}, {transform_indices = @transform_3, window_bounds = array<i64: 128, 128>}, {transform_indices = @transform_4, window_bounds = array<i64: 1, 128, 128>}]} {
    %c0_i32 = arith.constant 0 : i32
    %0 = arith.cmpi eq, %arg2, %c0_i32 : i32
    %1 = arith.extui %0 : i1 to i32
    %c0_i32_0 = arith.constant 0 : i32
    %2 = arith.cmpi ne, %1, %c0_i32_0 : i32
    scf.if %2 {
      %cst_13 = arith.constant 0.000000e+00 : f32
      %17 = vector.broadcast %cst_13 : f32 to vector<128x128xf32>
      %c0_14 = arith.constant 0 : index
      %c0_15 = arith.constant 0 : index
      %18 = vector.load %arg8[%c0_14, %c0_15] : memref<128x128xf32, #tpu.memory_space<vmem>>, vector<128x128xf32>
      tpu.vector_store %arg8[%c0_14, %c0_15], %17 {strides = array<i32>} : memref<128x128xf32, #tpu.memory_space<vmem>>, vector<128x128xf32>,
    } else {
    }
    %c0_i32_1 = arith.constant 0 : i32
    %3 = arith.cmpi eq, %arg1, %c0_i32_1 : i32
    %c0_i32_2 = arith.constant 0 : i32
    %4 = arith.cmpi eq, %arg2, %c0_i32_2 : i32
    %5 = arith.andi %3, %4 : i1
    %6 = arith.extui %5 : i1 to i32
    %c0_i32_3 = arith.constant 0 : i32
    %7 = arith.cmpi ne, %6, %c0_i32_3 : i32
    scf.if %7 {
      %cst_13 = arith.constant 0.000000e+00 : f32
      %17 = vector.broadcast %cst_13 : f32 to vector<1x128x128xf32>
      %c0_14 = arith.constant 0 : index
      %c0_15 = arith.constant 0 : index
      %c0_16 = arith.constant 0 : index
      %18 = vector.load %arg7[%c0_14, %c0_15, %c0_16] : memref<1x128x128xf32, #tpu.memory_space<vmem>>, vector<1x128x128xf32>
      tpu.vector_store %arg7[%c0_14, %c0_15, %c0_16], %17 {strides = array<i32>} : memref<1x128x128xf32, #tpu.memory_space<vmem>>, vector<1x128x128xf32>,
    } else {
    }
    %c0 = arith.constant 0 : index
    %c0_4 = arith.constant 0 : index
    %8 = vector.load %arg8[%c0, %c0_4] : memref<128x128xf32, #tpu.memory_space<vmem>>, vector<128x128xf32>
    %c0_5 = arith.constant 0 : index
    %c0_6 = arith.constant 0 : index
    %9 = vector.load %arg3[%c0_5, %c0_6] : memref<128x128xf32, #tpu.memory_space<vmem>>, vector<128x128xf32>
    %c0_7 = arith.constant 0 : index
    %c0_8 = arith.constant 0 : index
    %10 = vector.load %arg4[%c0_7, %c0_8] : memref<128x128xf32, #tpu.memory_space<vmem>>, vector<128x128xf32>
    %cst = arith.constant dense<0.000000e+00> : vector<128x128xf32>
    %11 = tpu.matmul %9, %10, %cst {dimension_numbers = #tpu.dot_dimension_numbers<[1], [1], [0], [0], [0, 0, 1, 0], [], []>} : vector<128x128xf32>, vector<128x128xf32>, vector<128x128xf32> -> vector<128x128xf32>
    %12 = arith.addf %8, %11 : vector<128x128xf32>
    %c0_9 = arith.constant 0 : index
    %c0_10 = arith.constant 0 : index
    %13 = vector.load %arg8[%c0_9, %c0_10] : memref<128x128xf32, #tpu.memory_space<vmem>>, vector<128x128xf32>
    tpu.vector_store %arg8[%c0_9, %c0_10], %12 {strides = array<i32>} : memref<128x128xf32, #tpu.memory_space<vmem>>, vector<128x128xf32>,
    %c0_i32_11 = arith.constant 0 : i32
    %14 = arith.cmpi eq, %arg2, %c0_i32_11 : i32
    %15 = arith.extui %14 : i1 to i32
    %c0_i32_12 = arith.constant 0 : i32
    %16 = arith.cmpi ne, %15, %c0_i32_12 : i32
    scf.if %16 {
      %c0_13 = arith.constant 0 : index
      %c0_14 = arith.constant 0 : index
      %17 = vector.load %arg8[%c0_13, %c0_14] : memref<128x128xf32, #tpu.memory_space<vmem>>, vector<128x128xf32>
      %c0_15 = arith.constant 0 : index
      %c0_16 = arith.constant 0 : index
      %18 = vector.load %arg6[%c0_15, %c0_16] : memref<128x128xf32, #tpu.memory_space<vmem>>, vector<128x128xf32>
      tpu.vector_store %arg6[%c0_15, %c0_16], %17 {strides = array<i32>} : memref<128x128xf32, #tpu.memory_space<vmem>>, vector<128x128xf32>,
      %c0_17 = arith.constant 0 : index
      %c0_18 = arith.constant 0 : index
      %c0_19 = arith.constant 0 : index
      %19 = vector.load %arg7[%c0_17, %c0_18, %c0_19] : memref<1x128x128xf32, #tpu.memory_space<vmem>>, vector<1x128x128xf32>
      %20 = vector.shape_cast %19 : vector<1x128x128xf32> to vector<128x128xf32>
      %c0_20 = arith.constant 0 : index
      %c0_21 = arith.constant 0 : index
      %21 = vector.load %arg5[%c0_20, %c0_21] : memref<128x128xf32, #tpu.memory_space<vmem>>, vector<128x128xf32>
      %cst_22 = arith.constant dense<0.000000e+00> : vector<128x128xf32>
      %22 = tpu.matmul %21, %17, %cst_22 {dimension_numbers = #tpu.dot_dimension_numbers<[1], [0], [0], [1], [0, 0, 1, 1], [], []>} : vector<128x128xf32>, vector<128x128xf32>, vector<128x128xf32> -> vector<128x128xf32>
      %23 = arith.addf %20, %22 : vector<128x128xf32>
      %c0_23 = arith.constant 0 : index
      %c0_24 = arith.constant 0 : index
      %c0_25 = arith.constant 0 : index
      %24 = vector.load %arg7[%c0_23, %c0_24, %c0_25] : memref<1x128x128xf32, #tpu.memory_space<vmem>>, vector<1x128x128xf32>
      %25 = vector.shape_cast %24 : vector<1x128x128xf32> to vector<128x128xf32>
      %26 = vector.shape_cast %23 : vector<128x128xf32> to vector<1x128x128xf32>
      tpu.vector_store %arg7[%c0_23, %c0_24, %c0_25], %26 {strides = array<i32>} : memref<1x128x128xf32, #tpu.memory_space<vmem>>, vector<1x128x128xf32>,
    } else {
    }
    return
  }
  func.func @transform_0(%arg0: i32, %arg1: i32, %arg2: i32) -> (i32, i32) {
    %c1_i32 = arith.constant 1 : i32
    %0 = arith.muli %arg0, %c1_i32 : i32
    %1 = arith.addi %0, %arg1 : i32
    %c0_i32 = arith.constant 0 : i32
    return %1, %arg2 : i32, i32
  }
  func.func @transform_1(%arg0: i32, %arg1: i32, %arg2: i32) -> (i32, i32) {
    %c0_i32 = arith.constant 0 : i32
    %c0_i32_0 = arith.constant 0 : i32
    return %c0_i32, %arg2 : i32, i32
  }
  func.func @transform_2(%arg0: i32, %arg1: i32, %arg2: i32) -> (i32, i32) {
    %c1_i32 = arith.constant 1 : i32
    %0 = arith.muli %arg0, %c1_i32 : i32
    %1 = arith.addi %0, %arg1 : i32
    %c0_i32 = arith.constant 0 : i32
    %c0_i32_0 = arith.constant 0 : i32
    return %c0_i32, %1 : i32, i32
  }
  func.func @transform_3(%arg0: i32, %arg1: i32, %arg2: i32) -> (i32, i32) {
    %c1_i32 = arith.constant 1 : i32
    %0 = arith.muli %arg0, %c1_i32 : i32
    %1 = arith.addi %0, %arg1 : i32
    %c0_i32 = arith.constant 0 : i32
    %c0_i32_0 = arith.constant 0 : i32
    return %1, %c0_i32 : i32, i32
  }
  func.func @transform_4(%arg0: i32, %arg1: i32, %arg2: i32) -> (i32, i32, i32) {
    %c0_i32 = arith.constant 0 : i32
    %c0_i32_0 = arith.constant 0 : i32
    %c0_i32_1 = arith.constant 0 : i32
    return %arg0, %c0_i32, %c0_i32_0 : i32, i32, i32
  }
}

</mosaic_0001>

<llo_original>
// kernel: tpu_custom_call.1
$region0: #{tpu_custom_call.1}
  #allocation0 [shape = 'u32[]', space=smem, size = 0x4, offset = 0x4, fixed_abs, tag = 'smem constant byte address 0x4 - core index']
  #allocation1 [shape = 'u32[72,128]{1,0:T(1,128)}', space=vmem, size = 0x9000, scoped, tag = 'internal scratch']
  #allocation2 [shape = 'f32[128,128]{1,0:T(8,128)}', space=vmem, size = 0x10000, scoped, tag = 'scratch operand']
  %s0 = inlined_call_operand.hbm [shape: f32[128,128], index: 0, kind: input, shape index: {}]
  %s1 = inlined_call_operand.hbm [shape: f32[128,128], index: 1, kind: input, shape index: {}]
  %s2 = inlined_call_operand.hbm [shape: f32[128,128], index: 2, kind: input, shape index: {}]
  %s3 = inlined_call_operand.hbm [shape: f32[128,128], index: 3, kind: output, shape index: {0}]
  %s4 = inlined_call_operand.hbm [shape: f32[1,128,128], index: 4, kind: output, shape index: {1}]
  %5 = xla_tuple %s3, %s4
  %s6 = sld [smem:[#allocation0]]
  $region54: #{tpu_custom_call.1} parent=0
    _
  %s8 = ssub.s32 1, %s6
  %s9 = scalar_select 0, %s8, %s6
  $region1: #{tpu_custom_call.1} parent=0
    #allocation3 [shape = 'u8[65536]{0}', space=vmem, size = 0x10000, scoped, tag = 'input window, operand 0, single buffered']
    #allocation4 [shape = 's32[1]{0}', space=sflag, size = 0x4, scoped, tag = 'scoped memory for tpu_custom_call.1']
    #allocation5 [shape = 's32[1]{0}', space=sflag, size = 0x4, scoped, tag = 'scoped memory for tpu_custom_call.1']
    #allocation6 [shape = 'u8[65536]{0}', space=vmem, size = 0x10000, scoped, tag = 'input window, operand 1, single buffered']
    #allocation7 [shape = 's32[1]{0}', space=sflag, size = 0x4, scoped, tag = 'scoped memory for tpu_custom_call.1']
    #allocation8 [shape = 'u8[65536]{0}', space=vmem, size = 0x10000, scoped, tag = 'input window, operand 2, single buffered']
    #allocation9 [shape = 'u8[65536]{0}', space=vmem, size = 0x10000, scoped, tag = 'output window, operand 0, single buffered']
    #allocation10 [shape = 'u8[65536]{0}', space=vmem, size = 0x10000, scoped, tag = 'output window, operand 1, single buffered']
    #allocation11 [shape = 's32[1]{0}', space=sflag, size = 0x4, scoped, tag = 'scoped memory for tpu_custom_call.1']
    %10 = vsyncpa [#allocation4], 0
    %11 = vsyncpa [#allocation7], 0
    %12 = vsyncpa [#allocation5], 0
    %13 = vsyncpa [#allocation11], 0
    // Predicated region
    $region2: #{tpu_custom_call.1} parent=1 // pred_check
      _
    $region3: #{tpu_custom_call.1} parent=1 // pred_check_branch
      %15 = sbr.rel (0) target = $region5
    $region4: #{tpu_custom_call.1} parent=1 // pred_region
      %s16 = sadd.s32 0, 0
      %s17 = smul.u32 16, %s16
      %19 = vsyncadd [#allocation4], 0
      %s20 = smul.addr %s17, 8
      %s21 = scalar_lea.hbm %s0, %s20
      %s22 = sshll.u32 %s21, 4
      %s23 = int_to_ptr.hbm [resolvable:$true] %s22
      %s24 = sshll.u32 [#allocation3], 4
      %s25 = int_to_ptr.vmem [resolvable:$true] %s24
      %30 = dma.hbm_to_vmem [thread:$0]  %s23, 2048, %s25, [#allocation4], 128, 128, 8
    $region5: #{tpu_custom_call.1} parent=1 // pred_fallthru
      _
    // Predicated region
    $region6: #{tpu_custom_call.1} parent=1 // pred_check
      _
    $region7: #{tpu_custom_call.1} parent=1 // pred_check_branch
      %32 = sbr.rel (0) target = $region9
    $region8: #{tpu_custom_call.1} parent=1 // pred_region
      %34 = vsyncadd [#allocation7], 0
      %s35 = sshll.u32 %s1, 4
      %s36 = int_to_ptr.hbm [resolvable:$true] %s35
      %s37 = sshll.u32 [#allocation6], 4
      %s38 = int_to_ptr.vmem [resolvable:$true] %s37
      %43 = dma.hbm_to_vmem [thread:$0]  %s36, 2048, %s38, [#allocation7], 128, 128, 8
    $region9: #{tpu_custom_call.1} parent=1 // pred_fallthru
      _
    // Predicated region
    $region10: #{tpu_custom_call.1} parent=1 // pred_check
      _
    $region11: #{tpu_custom_call.1} parent=1 // pred_check_branch
      %45 = sbr.rel (0) target = $region13
    $region12: #{tpu_custom_call.1} parent=1 // pred_region
      %s46 = sadd.s32 0, 0
      %48 = vsyncadd [#allocation7], 0
      %s49 = smul.addr %s46, 8
      %s50 = scalar_lea.hbm %s2, %s49
      %s51 = sshll.u32 %s50, 4
      %s52 = int_to_ptr.hbm [resolvable:$true] %s51
      %s53 = sshll.u32 [#allocation8], 4
      %s54 = int_to_ptr.vmem [resolvable:$true] %s53
      %59 = dma.hbm_to_vmem [thread:$0]  %s52, 2048, %s54, [#allocation7], 128, 128, 8
    $region13: #{tpu_custom_call.1} parent=1 // pred_fallthru
      _
    // Predicated region
    $region14: #{tpu_custom_call.1} parent=1 // pred_check
      _
    $region15: #{tpu_custom_call.1} parent=1 // pred_check_branch
      %61 = sbr.rel (0) target = $region17
    $region16: #{tpu_custom_call.1} parent=1 // pred_region
      %63 = dma.done [#allocation4], 2048
    $region17: #{tpu_custom_call.1} parent=1 // pred_fallthru
      _
    // Predicated region
    $region18: #{tpu_custom_call.1} parent=1 // pred_check
      _
    $region19: #{tpu_custom_call.1} parent=1 // pred_check_branch
      %65 = sbr.rel (0) target = $region21
    $region20: #{tpu_custom_call.1} parent=1 // pred_region
      %67 = dma.done [#allocation7], 2048
    $region21: #{tpu_custom_call.1} parent=1 // pred_fallthru
      _
    // Predicated region
    $region22: #{tpu_custom_call.1} parent=1 // pred_check
      _
    $region23: #{tpu_custom_call.1} parent=1 // pred_check_branch
      %69 = sbr.rel (0) target = $region25
    $region24: #{tpu_custom_call.1} parent=1 // pred_region
      %71 = dma.done [#allocation7], 2048
    $region25: #{tpu_custom_call.1} parent=1 // pred_fallthru
      _
    %s72 = sadd.s32 0, 0
    %s73 = smul.u32 16, %s72
    %s74 = sadd.s32 0, 0
    %s75 = sadd.s32 0, 0
    %s76 = smul.u32 16, %s75
    %p77 = scmp.eq.s32.totalorder 0, 0
    // Predicated region
    $region26: #{tpu_custom_call.1} parent=1 // pred_check
      %p78 = pneg %p77
    $region27: #{tpu_custom_call.1} parent=1 // pred_check_branch
      %80 = sbr.rel (%p78) target = $region29
    $region28: #{tpu_custom_call.1} parent=1 // pred_region
      %81 = vst [vmem:[#allocation2] sm:$0xff] 0.0
      %82 = vst [vmem:[#allocation2 + $0x8] sm:$0xff] 0.0
      %83 = vst [vmem:[#allocation2 + $0x10] sm:$0xff] 0.0
      %84 = vst [vmem:[#allocation2 + $0x18] sm:$0xff] 0.0
      %85 = vst [vmem:[#allocation2 + $0x20] sm:$0xff] 0.0
      %86 = vst [vmem:[#allocation2 + $0x28] sm:$0xff] 0.0
      %87 = vst [vmem:[#allocation2 + $0x30] sm:$0xff] 0.0
      %88 = vst [vmem:[#allocation2 + $0x38] sm:$0xff] 0.0
      %89 = vst [vmem:[#allocation2 + $0x40] sm:$0xff] 0.0
      %90 = vst [vmem:[#allocation2 + $0x48] sm:$0xff] 0.0
      %91 = vst [vmem:[#allocation2 + $0x50] sm:$0xff] 0.0
      %92 = vst [vmem:[#allocation2 + $0x58] sm:$0xff] 0.0
      %93 = vst [vmem:[#allocation2 + $0x60] sm:$0xff] 0.0
      %94 = vst [vmem:[#allocation2 + $0x68] sm:$0xff] 0.0
      %95 = vst [vmem:[#allocation2 + $0x70] sm:$0xff] 0.0
      %96 = vst [vmem:[#allocation2 + $0x78] sm:$0xff] 0.0
    $region29: #{tpu_custom_call.1} parent=1 // pred_fallthru
      _
    %p97 = scmp.eq.s32.totalorder 0, 0
    %p98 = pnand %p97, %p77
    %p99 = pneg %p98
    // Predicated region
    $region30: #{tpu_custom_call.1} parent=1 // pred_check
      _
    $region31: #{tpu_custom_call.1} parent=1 // pred_check_branch
      %101 = sbr.rel (%p98) target = $region33
    $region32: #{tpu_custom_call.1} parent=1 // pred_region
      %102 = vst [vmem:[#allocation10] sm:$0xff] 0.0
      %103 = vst [vmem:[#allocation10 + $0x8] sm:$0xff] 0.0
      %104 = vst [vmem:[#allocation10 + $0x10] sm:$0xff] 0.0
      %105 = vst [vmem:[#allocation10 + $0x18] sm:$0xff] 0.0
      %106 = vst [vmem:[#allocation10 + $0x20] sm:$0xff] 0.0
      %107 = vst [vmem:[#allocation10 + $0x28] sm:$0xff] 0.0
      %108 = vst [vmem:[#allocation10 + $0x30] sm:$0xff] 0.0
      %109 = vst [vmem:[#allocation10 + $0x38] sm:$0xff] 0.0
      %110 = vst [vmem:[#allocation10 + $0x40] sm:$0xff] 0.0
      %111 = vst [vmem:[#allocation10 + $0x48] sm:$0xff] 0.0
      %112 = vst [vmem:[#allocation10 + $0x50] sm:$0xff] 0.0
      %113 = vst [vmem:[#allocation10 + $0x58] sm:$0xff] 0.0
      %114 = vst [vmem:[#allocation10 + $0x60] sm:$0xff] 0.0
      %115 = vst [vmem:[#allocation10 + $0x68] sm:$0xff] 0.0
      %116 = vst [vmem:[#allocation10 + $0x70] sm:$0xff] 0.0
      %117 = vst [vmem:[#allocation10 + $0x78] sm:$0xff] 0.0
    $region33: #{tpu_custom_call.1} parent=1 // pred_fallthru
      _
    %v118 = vld [vmem:[#allocation2] sm:$0xff]
    %v119 = vld [vmem:[#allocation2 + $0x8] sm:$0xff]
    %v120 = vld [vmem:[#allocation2 + $0x10] sm:$0xff]
    %v121 = vld [vmem:[#allocation2 + $0x18] sm:$0xff]
    %v122 = vld [vmem:[#allocation2 + $0x20] sm:$0xff]
    %v123 = vld [vmem:[#allocation2 + $0x28] sm:$0xff]
    %v124 = vld [vmem:[#allocation2 + $0x30] sm:$0xff]
    %v125 = vld [vmem:[#allocation2 + $0x38] sm:$0xff]
    %v126 = vld [vmem:[#allocation2 + $0x40] sm:$0xff]
    %v127 = vld [vmem:[#allocation2 + $0x48] sm:$0xff]
    %v128 = vld [vmem:[#allocation2 + $0x50] sm:$0xff]
    %v129 = vld [vmem:[#allocation2 + $0x58] sm:$0xff]
    %v130 = vld [vmem:[#allocation2 + $0x60] sm:$0xff]
    %v131 = vld [vmem:[#allocation2 + $0x68] sm:$0xff]
    %v132 = vld [vmem:[#allocation2 + $0x70] sm:$0xff]
    %v133 = vld [vmem:[#allocation2 + $0x78] sm:$0xff]
    %v134 = vld [vmem:[#allocation3] sm:$0xff]
    %v135 = vld [vmem:[#allocation3 + $0x8] sm:$0xff]
    %v136 = vld [vmem:[#allocation3 + $0x10] sm:$0xff]
    %v137 = vld [vmem:[#allocation3 + $0x18] sm:$0xff]
    %v138 = vld [vmem:[#allocation3 + $0x20] sm:$0xff]
    %v139 = vld [vmem:[#allocation3 + $0x28] sm:$0xff]
    %v140 = vld [vmem:[#allocation3 + $0x30] sm:$0xff]
    %v141 = vld [vmem:[#allocation3 + $0x38] sm:$0xff]
    %v142 = vld [vmem:[#allocation3 + $0x40] sm:$0xff]
    %v143 = vld [vmem:[#allocation3 + $0x48] sm:$0xff]
    %v144 = vld [vmem:[#allocation3 + $0x50] sm:$0xff]
    %v145 = vld [vmem:[#allocation3 + $0x58] sm:$0xff]
    %v146 = vld [vmem:[#allocation3 + $0x60] sm:$0xff]
    %v147 = vld [vmem:[#allocation3 + $0x68] sm:$0xff]
    %v148 = vld [vmem:[#allocation3 + $0x70] sm:$0xff]
    %v149 = vld [vmem:[#allocation3 + $0x78] sm:$0xff]
    %v150 = vld [vmem:[#allocation6] sm:$0xff]
    %v151 = vld [vmem:[#allocation6 + $0x8] sm:$0xff]
    %v152 = vld [vmem:[#allocation6 + $0x10] sm:$0xff]
    %v153 = vld [vmem:[#allocation6 + $0x18] sm:$0xff]
    %v154 = vld [vmem:[#allocation6 + $0x20] sm:$0xff]
    %v155 = vld [vmem:[#allocation6 + $0x28] sm:$0xff]
    %v156 = vld [vmem:[#allocation6 + $0x30] sm:$0xff]
    %v157 = vld [vmem:[#allocation6 + $0x38] sm:$0xff]
    %v158 = vld [vmem:[#allocation6 + $0x40] sm:$0xff]
    %v159 = vld [vmem:[#allocation6 + $0x48] sm:$0xff]
    %v160 = vld [vmem:[#allocation6 + $0x50] sm:$0xff]
    %v161 = vld [vmem:[#allocation6 + $0x58] sm:$0xff]
    %v162 = vld [vmem:[#allocation6 + $0x60] sm:$0xff]
    %v163 = vld [vmem:[#allocation6 + $0x68] sm:$0xff]
    %v164 = vld [vmem:[#allocation6 + $0x70] sm:$0xff]
    %v165 = vld [vmem:[#allocation6 + $0x78] sm:$0xff]
    %166 = vmatpush.xpose.msra.mxu0 %v165
    %167 = vmatpush.xpose.msra.mxu0 %v164
    %168 = vmatpush.xpose.msra.mxu0 %v163
    %169 = vmatpush.xpose.msra.mxu0 %v162
    %170 = vmatpush.xpose.msra.mxu0 %v161
    %171 = vmatpush.xpose.msra.mxu0 %v160
    %172 = vmatpush.xpose.msra.mxu0 %v159
    %173 = vmatpush.xpose.msra.mxu0 %v158
    %174 = vmatpush.xpose.msra.mxu0 %v157
    %175 = vmatpush.xpose.msra.mxu0 %v156
    %176 = vmatpush.xpose.msra.mxu0 %v155
    %177 = vmatpush.xpose.msra.mxu0 %v154
    %178 = vmatpush.xpose.msra.mxu0 %v153
    %179 = vmatpush.xpose.msra.mxu0 %v152
    %180 = vmatpush.xpose.msra.mxu0 %v151
    %181 = vmatpush.xpose.msra.mxu0 %v150
    %182 = vmatmul.f32.gmra.mxu0 %v134
    %v183 = vpop.f32.mrf.mxu0
    %v184 = vadd.f32 0.0, %v183
    %185 = vmatmul.f32.gmra.mxu0 %v135
    %v186 = vpop.f32.mrf.mxu0
    %v187 = vadd.f32 0.0, %v186
    %188 = vmatmul.f32.gmra.mxu0 %v136
    %v189 = vpop.f32.mrf.mxu0
    %v190 = vadd.f32 0.0, %v189
    %191 = vmatmul.f32.gmra.mxu0 %v137
    %v192 = vpop.f32.mrf.mxu0
    %v193 = vadd.f32 0.0, %v192
    %194 = vmatmul.f32.gmra.mxu0 %v138
    %v195 = vpop.f32.mrf.mxu0
    %v196 = vadd.f32 0.0, %v195
    %197 = vmatmul.f32.gmra.mxu0 %v139
    %v198 = vpop.f32.mrf.mxu0
    %v199 = vadd.f32 0.0, %v198
    %200 = vmatmul.f32.gmra.mxu0 %v140
    %v201 = vpop.f32.mrf.mxu0
    %v202 = vadd.f32 0.0, %v201
    %203 = vmatmul.f32.gmra.mxu0 %v141
    %v204 = vpop.f32.mrf.mxu0
    %v205 = vadd.f32 0.0, %v204
    %206 = vmatmul.f32.gmra.mxu0 %v142
    %v207 = vpop.f32.mrf.mxu0
    %v208 = vadd.f32 0.0, %v207
    %209 = vmatmul.f32.gmra.mxu0 %v143
    %v210 = vpop.f32.mrf.mxu0
    %v211 = vadd.f32 0.0, %v210
    %212 = vmatmul.f32.gmra.mxu0 %v144
    %v213 = vpop.f32.mrf.mxu0
    %v214 = vadd.f32 0.0, %v213
    %215 = vmatmul.f32.gmra.mxu0 %v145
    %v216 = vpop.f32.mrf.mxu0
    %v217 = vadd.f32 0.0, %v216
    %218 = vmatmul.f32.gmra.mxu0 %v146
    %v219 = vpop.f32.mrf.mxu0
    %v220 = vadd.f32 0.0, %v219
    %221 = vmatmul.f32.gmra.mxu0 %v147
    %v222 = vpop.f32.mrf.mxu0
    %v223 = vadd.f32 0.0, %v222
    %224 = vmatmul.f32.gmra.mxu0 %v148
    %v225 = vpop.f32.mrf.mxu0
    %v226 = vadd.f32 0.0, %v225
    %227 = vmatmul.f32.gmra.mxu0 %v149
    %v228 = vpop.f32.mrf.mxu0
    %v229 = vadd.f32 0.0, %v228
    %230 = vdwg.mxu0
    %v231 = vadd.f32 %v118, %v184
    %v232 = vadd.f32 %v119, %v187
    %v233 = vadd.f32 %v120, %v190
    %v234 = vadd.f32 %v121, %v193
    %v235 = vadd.f32 %v122, %v196
    %v236 = vadd.f32 %v123, %v199
    %v237 = vadd.f32 %v124, %v202
    %v238 = vadd.f32 %v125, %v205
    %v239 = vadd.f32 %v126, %v208
    %v240 = vadd.f32 %v127, %v211
    %v241 = vadd.f32 %v128, %v214
    %v242 = vadd.f32 %v129, %v217
    %v243 = vadd.f32 %v130, %v220
    %v244 = vadd.f32 %v131, %v223
    %v245 = vadd.f32 %v132, %v226
    %v246 = vadd.f32 %v133, %v229
    %247 = vst [vmem:[#allocation2] sm:$0xff] %v231
    %248 = vst [vmem:[#allocation2 + $0x8] sm:$0xff] %v232
    %249 = vst [vmem:[#allocation2 + $0x10] sm:$0xff] %v233
    %250 = vst [vmem:[#allocation2 + $0x18] sm:$0xff] %v234
    %251 = vst [vmem:[#allocation2 + $0x20] sm:$0xff] %v235
    %252 = vst [vmem:[#allocation2 + $0x28] sm:$0xff] %v236
    %253 = vst [vmem:[#allocation2 + $0x30] sm:$0xff] %v237
    %254 = vst [vmem:[#allocation2 + $0x38] sm:$0xff] %v238
    %255 = vst [vmem:[#allocation2 + $0x40] sm:$0xff] %v239
    %256 = vst [vmem:[#allocation2 + $0x48] sm:$0xff] %v240
    %257 = vst [vmem:[#allocation2 + $0x50] sm:$0xff] %v241
    %258 = vst [vmem:[#allocation2 + $0x58] sm:$0xff] %v242
    %259 = vst [vmem:[#allocation2 + $0x60] sm:$0xff] %v243
    %260 = vst [vmem:[#allocation2 + $0x68] sm:$0xff] %v244
    %261 = vst [vmem:[#allocation2 + $0x70] sm:$0xff] %v245
    %262 = vst [vmem:[#allocation2 + $0x78] sm:$0xff] %v246
    // Predicated region
    $region34: #{tpu_custom_call.1} parent=1 // pred_check
      %p263 = pneg %p77
    $region35: #{tpu_custom_call.1} parent=1 // pred_check_branch
      %265 = sbr.rel (%p263) target = $region37
    $region36: #{tpu_custom_call.1} parent=1 // pred_region
      %v266 = vld [vmem:[#allocation2] sm:$0xff]
      %v267 = vld [vmem:[#allocation2 + $0x8] sm:$0xff]
      %v268 = vld [vmem:[#allocation2 + $0x10] sm:$0xff]
      %v269 = vld [vmem:[#allocation2 + $0x18] sm:$0xff]
      %v270 = vld [vmem:[#allocation2 + $0x20] sm:$0xff]
      %v271 = vld [vmem:[#allocation2 + $0x28] sm:$0xff]
      %v272 = vld [vmem:[#allocation2 + $0x30] sm:$0xff]
      %v273 = vld [vmem:[#allocation2 + $0x38] sm:$0xff]
      %v274 = vld [vmem:[#allocation2 + $0x40] sm:$0xff]
      %v275 = vld [vmem:[#allocation2 + $0x48] sm:$0xff]
      %v276 = vld [vmem:[#allocation2 + $0x50] sm:$0xff]
      %v277 = vld [vmem:[#allocation2 + $0x58] sm:$0xff]
      %v278 = vld [vmem:[#allocation2 + $0x60] sm:$0xff]
      %v279 = vld [vmem:[#allocation2 + $0x68] sm:$0xff]
      %v280 = vld [vmem:[#allocation2 + $0x70] sm:$0xff]
      %v281 = vld [vmem:[#allocation2 + $0x78] sm:$0xff]
      %282 = vst [vmem:[#allocation9] sm:$0xff] %v266
      %283 = vst [vmem:[#allocation9 + $0x8] sm:$0xff] %v267
      %284 = vst [vmem:[#allocation9 + $0x10] sm:$0xff] %v268
      %285 = vst [vmem:[#allocation9 + $0x18] sm:$0xff] %v269
      %286 = vst [vmem:[#allocation9 + $0x20] sm:$0xff] %v270
      %287 = vst [vmem:[#allocation9 + $0x28] sm:$0xff] %v271
      %288 = vst [vmem:[#allocation9 + $0x30] sm:$0xff] %v272
      %289 = vst [vmem:[#allocation9 + $0x38] sm:$0xff] %v273
      %290 = vst [vmem:[#allocation9 + $0x40] sm:$0xff] %v274
      %291 = vst [vmem:[#allocation9 + $0x48] sm:$0xff] %v275
      %292 = vst [vmem:[#allocation9 + $0x50] sm:$0xff] %v276
      %293 = vst [vmem:[#allocation9 + $0x58] sm:$0xff] %v277
      %294 = vst [vmem:[#allocation9 + $0x60] sm:$0xff] %v278
      %295 = vst [vmem:[#allocation9 + $0x68] sm:$0xff] %v279
      %296 = vst [vmem:[#allocation9 + $0x70] sm:$0xff] %v280
      %297 = vst [vmem:[#allocation9 + $0x78] sm:$0xff] %v281
      %v298 = vld [vmem:[#allocation10] sm:$0xff]
      %v299 = vld [vmem:[#allocation10 + $0x8] sm:$0xff]
      %v300 = vld [vmem:[#allocation10 + $0x10] sm:$0xff]
      %v301 = vld [vmem:[#allocation10 + $0x18] sm:$0xff]
      %v302 = vld [vmem:[#allocation10 + $0x20] sm:$0xff]
      %v303 = vld [vmem:[#allocation10 + $0x28] sm:$0xff]
      %v304 = vld [vmem:[#allocation10 + $0x30] sm:$0xff]
      %v305 = vld [vmem:[#allocation10 + $0x38] sm:$0xff]
      %v306 = vld [vmem:[#allocation10 + $0x40] sm:$0xff]
      %v307 = vld [vmem:[#allocation10 + $0x48] sm:$0xff]
      %v308 = vld [vmem:[#allocation10 + $0x50] sm:$0xff]
      %v309 = vld [vmem:[#allocation10 + $0x58] sm:$0xff]
      %v310 = vld [vmem:[#allocation10 + $0x60] sm:$0xff]
      %v311 = vld [vmem:[#allocation10 + $0x68] sm:$0xff]
      %v312 = vld [vmem:[#allocation10 + $0x70] sm:$0xff]
      %v313 = vld [vmem:[#allocation10 + $0x78] sm:$0xff]
      %v314 = vld [vmem:[#allocation8] sm:$0xff]
      %v315 = vld [vmem:[#allocation8 + $0x8] sm:$0xff]
      %v316 = vld [vmem:[#allocation8 + $0x10] sm:$0xff]
      %v317 = vld [vmem:[#allocation8 + $0x18] sm:$0xff]
      %v318 = vld [vmem:[#allocation8 + $0x20] sm:$0xff]
      %v319 = vld [vmem:[#allocation8 + $0x28] sm:$0xff]
      %v320 = vld [vmem:[#allocation8 + $0x30] sm:$0xff]
      %v321 = vld [vmem:[#allocation8 + $0x38] sm:$0xff]
      %v322 = vld [vmem:[#allocation8 + $0x40] sm:$0xff]
      %v323 = vld [vmem:[#allocation8 + $0x48] sm:$0xff]
      %v324 = vld [vmem:[#allocation8 + $0x50] sm:$0xff]
      %v325 = vld [vmem:[#allocation8 + $0x58] sm:$0xff]
      %v326 = vld [vmem:[#allocation8 + $0x60] sm:$0xff]
      %v327 = vld [vmem:[#allocation8 + $0x68] sm:$0xff]
      %v328 = vld [vmem:[#allocation8 + $0x70] sm:$0xff]
      %v329 = vld [vmem:[#allocation8 + $0x78] sm:$0xff]
      %330 = vmatpush.msra.mxu0 %v281
      %331 = vmatpush.msra.mxu0 %v280
      %332 = vmatpush.msra.mxu0 %v279
      %333 = vmatpush.msra.mxu0 %v278
      %334 = vmatpush.msra.mxu0 %v277
      %335 = vmatpush.msra.mxu0 %v276
      %336 = vmatpush.msra.mxu0 %v275
      %337 = vmatpush.msra.mxu0 %v274
      %338 = vmatpush.msra.mxu0 %v273
      %339 = vmatpush.msra.mxu0 %v272
      %340 = vmatpush.msra.mxu0 %v271
      %341 = vmatpush.msra.mxu0 %v270
      %342 = vmatpush.msra.mxu0 %v269
      %343 = vmatpush.msra.mxu0 %v268
      %344 = vmatpush.msra.mxu0 %v267
      %345 = vmatpush.msra.mxu0 %v266
      %346 = vmatmul.f32.gmra.mxu0 %v314
      %v347 = vpop.f32.mrf.mxu0
      %v348 = vadd.f32 0.0, %v347
      %349 = vmatmul.f32.gmra.mxu0 %v315
      %v350 = vpop.f32.mrf.mxu0
      %v351 = vadd.f32 0.0, %v350
      %352 = vmatmul.f32.gmra.mxu0 %v316
      %v353 = vpop.f32.mrf.mxu0
      %v354 = vadd.f32 0.0, %v353
      %355 = vmatmul.f32.gmra.mxu0 %v317
      %v356 = vpop.f32.mrf.mxu0
      %v357 = vadd.f32 0.0, %v356
      %358 = vmatmul.f32.gmra.mxu0 %v318
      %v359 = vpop.f32.mrf.mxu0
      %v360 = vadd.f32 0.0, %v359
      %361 = vmatmul.f32.gmra.mxu0 %v319
      %v362 = vpop.f32.mrf.mxu0
      %v363 = vadd.f32 0.0, %v362
      %364 = vmatmul.f32.gmra.mxu0 %v320
      %v365 = vpop.f32.mrf.mxu0
      %v366 = vadd.f32 0.0, %v365
      %367 = vmatmul.f32.gmra.mxu0 %v321
      %v368 = vpop.f32.mrf.mxu0
      %v369 = vadd.f32 0.0, %v368
      %370 = vmatmul.f32.gmra.mxu0 %v322
      %v371 = vpop.f32.mrf.mxu0
      %v372 = vadd.f32 0.0, %v371
      %373 = vmatmul.f32.gmra.mxu0 %v323
      %v374 = vpop.f32.mrf.mxu0
      %v375 = vadd.f32 0.0, %v374
      %376 = vmatmul.f32.gmra.mxu0 %v324
      %v377 = vpop.f32.mrf.mxu0
      %v378 = vadd.f32 0.0, %v377
      %379 = vmatmul.f32.gmra.mxu0 %v325
      %v380 = vpop.f32.mrf.mxu0
      %v381 = vadd.f32 0.0, %v380
      %382 = vmatmul.f32.gmra.mxu0 %v326
      %v383 = vpop.f32.mrf.mxu0
      %v384 = vadd.f32 0.0, %v383
      %385 = vmatmul.f32.gmra.mxu0 %v327
      %v386 = vpop.f32.mrf.mxu0
      %v387 = vadd.f32 0.0, %v386
      %388 = vmatmul.f32.gmra.mxu0 %v328
      %v389 = vpop.f32.mrf.mxu0
      %v390 = vadd.f32 0.0, %v389
      %391 = vmatmul.f32.gmra.mxu0 %v329
      %v392 = vpop.f32.mrf.mxu0
      %v393 = vadd.f32 0.0, %v392
      %394 = vdwg.mxu0
      %v395 = vadd.f32 %v298, %v348
      %v396 = vadd.f32 %v299, %v351
      %v397 = vadd.f32 %v300, %v354
      %v398 = vadd.f32 %v301, %v357
      %v399 = vadd.f32 %v302, %v360
      %v400 = vadd.f32 %v303, %v363
      %v401 = vadd.f32 %v304, %v366
      %v402 = vadd.f32 %v305, %v369
      %v403 = vadd.f32 %v306, %v372
      %v404 = vadd.f32 %v307, %v375
      %v405 = vadd.f32 %v308, %v378
      %v406 = vadd.f32 %v309, %v381
      %v407 = vadd.f32 %v310, %v384
      %v408 = vadd.f32 %v311, %v387
      %v409 = vadd.f32 %v312, %v390
      %v410 = vadd.f32 %v313, %v393
      %411 = vst [vmem:[#allocation10] sm:$0xff] %v395
      %412 = vst [vmem:[#allocation10 + $0x8] sm:$0xff] %v396
      %413 = vst [vmem:[#allocation10 + $0x10] sm:$0xff] %v397
      %414 = vst [vmem:[#allocation10 + $0x18] sm:$0xff] %v398
      %415 = vst [vmem:[#allocation10 + $0x20] sm:$0xff] %v399
      %416 = vst [vmem:[#allocation10 + $0x28] sm:$0xff] %v400
      %417 = vst [vmem:[#allocation10 + $0x30] sm:$0xff] %v401
      %418 = vst [vmem:[#allocation10 + $0x38] sm:$0xff] %v402
      %419 = vst [vmem:[#allocation10 + $0x40] sm:$0xff] %v403
      %420 = vst [vmem:[#allocation10 + $0x48] sm:$0xff] %v404
      %421 = vst [vmem:[#allocation10 + $0x50] sm:$0xff] %v405
      %422 = vst [vmem:[#allocation10 + $0x58] sm:$0xff] %v406
      %423 = vst [vmem:[#allocation10 + $0x60] sm:$0xff] %v407
      %424 = vst [vmem:[#allocation10 + $0x68] sm:$0xff] %v408
      %425 = vst [vmem:[#allocation10 + $0x70] sm:$0xff] %v409
      %426 = vst [vmem:[#allocation10 + $0x78] sm:$0xff] %v410
    $region37: #{tpu_custom_call.1} parent=1 // pred_fallthru
      _
    // Predicated region
    $region38: #{tpu_custom_call.1} parent=1 // pred_check
      _
    $region39: #{tpu_custom_call.1} parent=1 // pred_check_branch
      %428 = sbr.rel (0) target = $region41
    $region40: #{tpu_custom_call.1} parent=1 // pred_region
      %s429 = sadd.s32 0, 0
      %s430 = smul.u32 16, %s429
      %432 = vsyncadd [#allocation5], 0
      %s433 = smul.addr %s430, 8
      %s434 = scalar_lea.hbm %s3, %s433
      %s435 = sshll.u32 [#allocation9], 4
      %s436 = int_to_ptr.vmem [resolvable:$true] %s435
      %s437 = sshll.u32 %s434, 4
      %s438 = int_to_ptr.hbm [resolvable:$true] %s437
      %443 = dma.vmem_to_hbm [thread:$0]  %s436, 2048, %s438, [#allocation5], 128, 128, 8
    $region41: #{tpu_custom_call.1} parent=1 // pred_fallthru
      _
    // Predicated region
    $region42: #{tpu_custom_call.1} parent=1 // pred_check
      _
    $region43: #{tpu_custom_call.1} parent=1 // pred_check_branch
      %445 = sbr.rel (0) target = $region45
    $region44: #{tpu_custom_call.1} parent=1 // pred_region
      %447 = vsyncadd [#allocation11], 0
      %s448 = sshll.u32 [#allocation10], 4
      %s449 = int_to_ptr.vmem [resolvable:$true] %s448
      %s450 = sshll.u32 %s4, 4
      %s451 = int_to_ptr.hbm [resolvable:$true] %s450
      %456 = dma.vmem_to_hbm [thread:$0]  %s449, 2048, %s451, [#allocation11], 128, 128, 8
    $region45: #{tpu_custom_call.1} parent=1 // pred_fallthru
      _
    // Predicated region
    $region46: #{tpu_custom_call.1} parent=1 // pred_check
      _
    $region47: #{tpu_custom_call.1} parent=1 // pred_check_branch
      %458 = sbr.rel (0) target = $region49
    $region48: #{tpu_custom_call.1} parent=1 // pred_region
      %460 = dma.done [#allocation5], 2048
    $region49: #{tpu_custom_call.1} parent=1 // pred_fallthru
      _
    // Predicated region
    $region50: #{tpu_custom_call.1} parent=1 // pred_check
      _
    $region51: #{tpu_custom_call.1} parent=1 // pred_check_branch
      %462 = sbr.rel (0) target = $region53
    $region52: #{tpu_custom_call.1} parent=1 // pred_region
      %464 = dma.done [#allocation11], 2048
    $region53: #{tpu_custom_call.1} parent=1 // pred_fallthru
      _
    %465 = vsyncpa [#allocation4], 1
    %466 = vsyncpa [#allocation7], 1
    %467 = vsyncpa [#allocation5], 1
    %468 = vsyncpa [#allocation11], 1

</llo_original>
